<compile_context>
chip_gen: v6e
topology: v6e:2x2x1
jax: 0.10.0
libtpu: 0.0.40
codegen_flags: <defaults>
</compile_context>

<pallas_src>
import functools
import math

import jax
import jax.numpy as jnp
from jax.experimental import pallas as pl
from jax.experimental.pallas import tpu as pltpu


def _round_up(a: int, b: int) -> int:
    return ((a + b - 1) // b) * b


def _vmem_capacity_bytes() -> int:
    try:
        cap = int(pltpu.get_tpu_info().vmem_capacity_bytes)
        if cap > 0:
            return cap
    except Exception:
        pass
    return 64 * 1024 * 1024  # conservative fallback (v7x per-core VMEM)


# ---------------------------------------------------------------------------
# Pallas kernel
# ---------------------------------------------------------------------------
def _ls_loss_kernel(x_ref, t_ref, out_ref, acc_ref, *,
                    n_rows, tile_rows, tiles_per_chunk,
                    fill, cmf, lse_coef, entropy,
                    ign_coef, ign_col, ignore_index):
    g = pl.program_id(0)          # chunk (TensorCore) axis, "parallel"
    t = pl.program_id(1)          # tile-within-chunk axis, "arbitrary" (reduction)

    @pl.when(t == 0)
    def _():
        acc_ref[...] = jnp.zeros_like(acc_ref)

    # Upcast in VMEM (bf16 inputs stream at half the HBM bytes).
    x = x_ref[...].astype(jnp.float32)                       # (TR, C)
    tgt = t_ref[...]                                         # (TR, 1) int32

    # Numerically stable log-sum-exp; per-row (lane-axis) reductions only.
    m = jnp.max(x, axis=-1, keepdims=True)                   # (TR, 1)
    se = jnp.sum(jnp.exp(x - m), axis=-1, keepdims=True)
    lse = jnp.log(se) + m                                    # (TR, 1)

    col = jax.lax.broadcasted_iota(jnp.int32, x.shape, 1)    # (TR, C)
    if fill != 0.0:
        # Fused weighted row-sum: sum_j w_j x_j, w_j = fill + cmf * [j == tgt].
        w = jnp.where(col == tgt, cmf + fill, fill)
        wsum = jnp.sum(w * x, axis=-1, keepdims=True)        # (TR, 1)
    else:
        # NLL path (smoothing == 0): only the target column contributes.
        wsum = cmf * jnp.sum(jnp.where(col == tgt, x, 0.0), axis=-1, keepdims=True)

    per_row = entropy + lse_coef * lse - wsum                # (TR, 1)

    if ign_coef != 0.0:
        # Ignore-column correction via a static lane slice (no full-tile pass).
        x_ign = x_ref[:, ign_col:ign_col + 1].astype(jnp.float32)
        per_row = per_row + ign_coef * x_ign

    # Mask rows past N (partial / phantom tiles) and ignored rows.
    tile_idx = g * tiles_per_chunk + t
    row = tile_idx * tile_rows + jax.lax.broadcasted_iota(
        jnp.int32, (tile_rows, 1), 0)
    valid = (row < n_rows) & (tgt != ignore_index)
    acc_ref[...] += jnp.where(valid, per_row, 0.0)

    @pl.when(t == pl.num_programs(1) - 1)
    def _():
        out_ref[...] = jnp.full(out_ref.shape, jnp.sum(acc_ref[...]),
                                dtype=out_ref.dtype)


# ---------------------------------------------------------------------------
# pallas_call wrapper: returns the scalar sum of per-element KL / NLL terms.
# ---------------------------------------------------------------------------
def _loss_sum_pallas(logits, targets, *, ignore_index, fill, cmf, entropy,
                     ign_coef, ign_col, tile_rows=None):
    n, c = logits.shape
    in_itemsize = logits.dtype.itemsize

    vmem_cap = _vmem_capacity_bytes()
    vmem_limit = max(32 * 1024 * 1024, min((vmem_cap * 3) // 4, 96 * 1024 * 1024))
    budget = vmem_limit // 2
    # Double-buffered input tile at its native dtype + ~4 f32 full-tile temporaries.
    bytes_per_row = c * (2 * in_itemsize + 4 * 4)

    if 8 * bytes_per_row > budget:
        # TODO(synk): C-split (lane-tiled online-logsumexp) path for very large vocabularies.
        raise NotImplementedError(
            f"n_labels={c} too large for the single-pass row kernel "
            f"(needs {8 * bytes_per_row} B > {budget} B VMEM budget)")

    if tile_rows is None:
        tile_rows = max(8, ((budget // bytes_per_row) // 8) * 8)
    else:
        tile_rows = max(8, _round_up(int(tile_rows), 8))
    tile_rows = min(tile_rows, _round_up(n, 8))

    total_tiles = pl.cdiv(n, tile_rows)
    n_chunks = 2 if total_tiles >= 2 else 1      # one chunk per TensorCore on dual-TC parts
    tiles_per_chunk = pl.cdiv(total_tiles, n_chunks)
    last_tile = total_tiles - 1

    def in_index(g, t):
        # Phantom tiles of a ragged split are clamped to the last real tile; their
        # rows are discarded by the in-kernel row mask.
        return (jnp.minimum(g * tiles_per_chunk + t, last_tile), 0)

    lse_coef = cmf + c * fill - ign_coef

    kernel = functools.partial(
        _ls_loss_kernel,
        n_rows=n, tile_rows=tile_rows, tiles_per_chunk=tiles_per_chunk,
        fill=fill, cmf=cmf, lse_coef=lse_coef, entropy=entropy,
        ign_coef=ign_coef, ign_col=ign_col, ignore_index=ignore_index)

    targets_2d = targets.reshape(n, 1).astype(jnp.int32)

    out = pl.pallas_call(
        kernel,
        out_shape=jax.ShapeDtypeStruct((n_chunks, 8, 128), jnp.float32),
        grid_spec=pltpu.PrefetchScalarGridSpec(
            num_scalar_prefetch=0,
            grid=(n_chunks, tiles_per_chunk),
            in_specs=[
                pl.BlockSpec((tile_rows, c), in_index),
                pl.BlockSpec((tile_rows, 1), in_index),
            ],
            out_specs=pl.BlockSpec((1, 8, 128), lambda g, t: (g, 0, 0)),
            scratch_shapes=[pltpu.VMEM((tile_rows, 1), jnp.float32)],
        ),
        compiler_params=pltpu.CompilerParams(
            dimension_semantics=("parallel", "arbitrary"),
            vmem_limit_bytes=int(vmem_limit)),
    )(logits, targets_2d)
    return jnp.sum(out[:, 0, 0])


# ---------------------------------------------------------------------------
# Module-equivalent wrapper
# ---------------------------------------------------------------------------
class LabelSmoothingLoss:
    def __init__(self, n_labels, smoothing=0.0, ignore_index=-100,
                 reduction="mean"):
        assert 0 <= smoothing <= 1
        self.n_labels = int(n_labels)
        self.smoothing = float(smoothing)
        self.confidence = 1.0 - float(smoothing)
        self.ignore_index = int(ignore_index)
        self.reduction = reduction

        if self.smoothing > 0:
            n_ignore = 1 + (self.ignore_index >= 0)
            self.fill = self.smoothing / (self.n_labels - n_ignore)
            self.cmf = self.confidence - self.fill
            ent = 0.0
            if self.confidence > 0:
                ent += self.confidence * math.log(self.confidence)
            if self.fill > 0:
                ent += (self.n_labels - n_ignore) * self.fill * math.log(self.fill)
            self.entropy = ent
            self.ign_coef = self.fill if self.ignore_index >= 0 else 0.0
            self.ign_col = self.ignore_index if self.ignore_index >= 0 else 0
        else:
            # NLL path: fill == 0, confidence == 1, no entropy term.
            self.fill = 0.0
            self.cmf = 1.0
            self.entropy = 0.0
            self.ign_coef = 0.0
            self.ign_col = 0

    def __call__(self, inputs, targets, *, tile_rows=None):
        n = targets.shape[0]
        loss_sum = _loss_sum_pallas(
            inputs, targets,
            ignore_index=self.ignore_index, fill=self.fill, cmf=self.cmf,
            entropy=self.entropy, ign_coef=self.ign_coef, ign_col=self.ign_col,
            tile_rows=tile_rows)

        if self.smoothing > 0:
            # 'mean' is promoted to KLDivLoss 'batchmean' (divide by batch size).
            if self.reduction in ("mean", "batchmean"):
                return loss_sum / n
            if self.reduction == "sum":
                return loss_sum
            raise NotImplementedError(self.reduction)  # TODO(synk): 'none'
        else:
            if self.reduction == "mean":
                count = jnp.sum((targets != self.ignore_index).astype(jnp.float32))
                return loss_sum / count
            if self.reduction == "sum":
                return loss_sum
            raise NotImplementedError(self.reduction)  # TODO(synk): 'none'


# ---------------------------------------------------------------------------
# Pure-JAX reference (mirrors the PyTorch forward) for a sanity check.
# ---------------------------------------------------------------------------
def _reference(n_labels, smoothing, ignore_index, reduction, inputs, targets):
    x = inputs.astype(jnp.float32)
    logp = jax.nn.log_softmax(x, axis=-1)
    n = targets.shape[0]
    if smoothing > 0:
        n_ignore = 1 + (ignore_index >= 0)
        fill = smoothing / (n_labels - n_ignore)
        conf = 1.0 - smoothing
        dense = jnp.full((n, n_labels), fill, jnp.float32)
        if ignore_index >= 0:
            dense = dense.at[:, ignore_index].set(0.0)
        dense = dense.at[jnp.arange(n), targets].set(conf)
        if ignore_index >= 0:
            dense = jnp.where((targets == ignore_index)[:, None], 0.0, dense)
        safe = jnp.where(dense > 0, dense, 1.0)
        per = jnp.where(dense > 0, dense * (jnp.log(safe) - logp), 0.0)
        total = jnp.sum(per)
        if reduction in ("mean", "batchmean"):
            return total / n
        return total
    else:
        valid = targets != ignore_index
        nll = -jnp.take_along_axis(logp, targets[:, None].astype(jnp.int32),
                                   axis=-1)[:, 0]
        nll = jnp.where(valid, nll, 0.0)
        total = jnp.sum(nll)
        if reduction == "mean":
            return total / jnp.sum(valid.astype(jnp.float32))
        return total


if __name__ == "__main__":
    key = jax.random.PRNGKey(0)
    n, n_labels = 10, 32          # small batch (exercises partial-block masking), 32 classes
    ignore_index = 0
    smoothing = 0.1

    k1, k2 = jax.random.split(key)
    logits = jax.random.normal(k1, (n, n_labels), dtype=jnp.float32)
    targets = jax.random.randint(k2, (n,), 0, n_labels, dtype=jnp.int32)
    targets = targets.at[3].set(ignore_index)   # exercise ignore_index masking

    # 1) smoothing > 0 path (KLDivLoss, batchmean), f32 logits
    mod_smooth = LabelSmoothingLoss(n_labels, smoothing=smoothing,
                                    ignore_index=ignore_index, reduction="mean")
    loss_smooth = jax.block_until_ready(mod_smooth(logits, targets))
    ref_smooth = _reference(n_labels, smoothing, ignore_index, "mean",
                            logits, targets)

    # 2) smoothing == 0 path (NLLLoss, mean), f32 logits
    mod_nll = LabelSmoothingLoss(n_labels, smoothing=0.0,
                                 ignore_index=ignore_index, reduction="mean")
    loss_nll = jax.block_until_ready(mod_nll(logits, targets))
    ref_nll = _reference(n_labels, 0.0, ignore_index, "mean", logits, targets)

    # 3) bf16 logits pass through untouched (upcast happens inside the kernel)
    logits_bf16 = logits.astype(jnp.bfloat16)
    mod_sum = LabelSmoothingLoss(n_labels, smoothing=smoothing,
                                 ignore_index=ignore_index, reduction="sum")
    loss_bf16 = jax.block_until_ready(mod_sum(logits_bf16, targets))
    ref_bf16 = _reference(n_labels, smoothing, ignore_index, "sum",
                          logits_bf16, targets)

    # 4) multi-tile / dual-chunk grid path: explicit tile_rows=8 on 20 rows gives
    #    3 tiles -> 2 chunks with a clamped phantom tile and a partial last tile.
    n_big = 20
    k3, k4 = jax.random.split(k2)
    logits_big = jax.random.normal(k3, (n_big, n_labels), dtype=jnp.float32)
    targets_big = jax.random.randint(k4, (n_big,), 0, n_labels, dtype=jnp.int32)
    targets_big = targets_big.at[7].set(ignore_index)
    loss_big = jax.block_until_ready(
        mod_smooth(logits_big, targets_big, tile_rows=8))
    ref_big = _reference(n_labels, smoothing, ignore_index, "mean",
                         logits_big, targets_big)

    assert jnp.allclose(loss_smooth, ref_smooth, atol=1e-4, rtol=1e-4), (
        loss_smooth, ref_smooth)
    assert jnp.allclose(loss_nll, ref_nll, atol=1e-4, rtol=1e-4), (
        loss_nll, ref_nll)
    assert jnp.allclose(loss_bf16, ref_bf16, atol=1e-3, rtol=1e-3), (
        loss_bf16, ref_bf16)
    assert jnp.allclose(loss_big, ref_big, atol=1e-4, rtol=1e-4), (
        loss_big, ref_big)

    print("KERNEL_OK")
</pallas_src>

<mosaic_0001>
module attributes {stable_mosaic.version = 11 : i64} {
  func.func @_ls_loss_kernel(%arg0: i32, %arg1: i32, %arg2: memref<16x32xf32, #tpu.memory_space<vmem>>, %arg3: memref<16x1xi32, #tpu.memory_space<vmem>>, %arg4: memref<1x8x128xf32, #tpu.memory_space<vmem>>, %arg5: memref<16x1xf32, #tpu.memory_space<vmem>>) attributes {dimension_semantics = [#tpu.dimension_semantics<parallel>, #tpu.dimension_semantics<arbitrary>], iteration_bounds = array<i64: 1, 1>, scalar_prefetch = 0 : i64, scratch_operands = 1 : i64, tpu.core_type = #tpu.core_type<tc>, window_params = [{transform_indices = @transform_0, window_bounds = array<i64: 16, 32>}, {transform_indices = @transform_1, window_bounds = array<i64: 16, 1>}, {transform_indices = @transform_2, window_bounds = array<i64: 1, 8, 128>}]} {
    %c0_i32 = arith.constant 0 : i32
    %0 = arith.cmpi eq, %arg1, %c0_i32 : i32
    %1 = arith.extui %0 : i1 to i32
    %c0_i32_0 = arith.constant 0 : i32
    %2 = arith.cmpi ne, %1, %c0_i32_0 : i32
    scf.if %2 {
      %cst_21 = arith.constant 0.000000e+00 : f32
      %51 = vector.broadcast %cst_21 : f32 to vector<16x1xf32>
      %c0_22 = arith.constant 0 : index
      %c0_23 = arith.constant 0 : index
      %52 = vector.load %arg5[%c0_22, %c0_23] : memref<16x1xf32, #tpu.memory_space<vmem>>, vector<16x1xf32>
      tpu.vector_store %arg5[%c0_22, %c0_23], %51 {strides = array<i32>} : memref<16x1xf32, #tpu.memory_space<vmem>>, vector<16x1xf32>,
    } else {
    }
    %c0 = arith.constant 0 : index
    %c0_1 = arith.constant 0 : index
    %3 = vector.load %arg2[%c0, %c0_1] : memref<16x32xf32, #tpu.memory_space<vmem>>, vector<16x32xf32>
    %c0_2 = arith.constant 0 : index
    %c0_3 = arith.constant 0 : index
    %4 = vector.load %arg3[%c0_2, %c0_3] : memref<16x1xi32, #tpu.memory_space<vmem>>, vector<16x1xi32>
    %cst = arith.constant dense<0xFF800000> : vector<16xf32>
    %5 = vector.multi_reduction <maximumf>, %3, %cst [1] : vector<16x32xf32> to vector<16xf32>
    %6 = vector.shape_cast %5 : vector<16xf32> to vector<16x1xf32>
    %7 = vector.broadcast %6 : vector<16x1xf32> to vector<16x32xf32>
    %8 = arith.subf %3, %7 : vector<16x32xf32>
    %9 = math.exp %8 : vector<16x32xf32>
    %cst_4 = arith.constant dense<0.000000e+00> : vector<16xf32>
    %10 = vector.multi_reduction <add>, %9, %cst_4 [1] : vector<16x32xf32> to vector<16xf32>
    %11 = vector.shape_cast %10 : vector<16xf32> to vector<16x1xf32>
    %12 = math.log %11 : vector<16x1xf32>
    %13 = arith.addf %12, %6 : vector<16x1xf32>
    %14 = tpu.iota {dimensions = array<i32: 1>} : vector<16x32xi32>
    %15 = vector.broadcast %4 : vector<16x1xi32> to vector<16x32xi32>
    %16 = arith.cmpi eq, %14, %15 : vector<16x32xi32>
    %cst_5 = arith.constant 0.899999976 : f32
    %cst_6 = arith.constant 0.00333333341 : f32
    %17 = vector.broadcast %cst_5 : f32 to vector<16x32xf32>
    %18 = vector.broadcast %cst_6 : f32 to vector<16x32xf32>
    %19 = arith.select %16, %17, %18 : vector<16x32xi1>, vector<16x32xf32>
    %20 = arith.mulf %19, %3 : vector<16x32xf32>
    %cst_7 = arith.constant dense<0.000000e+00> : vector<16xf32>
    %21 = vector.multi_reduction <add>, %20, %cst_7 [1] : vector<16x32xf32> to vector<16xf32>
    %22 = vector.shape_cast %21 : vector<16xf32> to vector<16x1xf32>
    %cst_8 = arith.constant 1.000000e+00 : f32
    %23 = vector.broadcast %cst_8 : f32 to vector<16x1xf32>
    %24 = arith.mulf %23, %13 : vector<16x1xf32>
    %cst_9 = arith.constant -0.665202737 : f32
    %25 = vector.broadcast %cst_9 : f32 to vector<16x1xf32>
    %26 = arith.addf %25, %24 : vector<16x1xf32>
    %27 = arith.subf %26, %22 : vector<16x1xf32>
    %c0_10 = arith.constant 0 : index
    %c0_11 = arith.constant 0 : index
    %28 = vector.load %arg2[%c0_10, %c0_11] : memref<16x32xf32, #tpu.memory_space<vmem>>, vector<16x1xf32>
    %cst_12 = arith.constant 0.00333333341 : f32
    %29 = vector.broadcast %cst_12 : f32 to vector<16x1xf32>
    %30 = arith.mulf %29, %28 : vector<16x1xf32>
    %31 = arith.addf %27, %30 : vector<16x1xf32>
    %c1_i32 = arith.constant 1 : i32
    %32 = arith.muli %arg0, %c1_i32 : i32
    %33 = arith.addi %32, %arg1 : i32
    %c16_i32 = arith.constant 16 : i32
    %34 = arith.muli %33, %c16_i32 : i32
    %35 = tpu.iota {dimensions = array<i32: 0>} : vector<16x1xi32>
    %36 = vector.broadcast %34 : i32 to vector<16x1xi32>
    %37 = arith.addi %36, %35 : vector<16x1xi32>
    %c10_i32 = arith.constant 10 : i32
    %38 = vector.broadcast %c10_i32 : i32 to vector<16x1xi32>
    %39 = arith.cmpi slt, %37, %38 : vector<16x1xi32>
    %c0_i32_13 = arith.constant 0 : i32
    %40 = vector.broadcast %c0_i32_13 : i32 to vector<16x1xi32>
    %41 = arith.cmpi ne, %4, %40 : vector<16x1xi32>
    %42 = arith.andi %39, %41 : vector<16x1xi1>
    %c0_14 = arith.constant 0 : index
    %c0_15 = arith.constant 0 : index
    %43 = vector.load %arg5[%c0_14, %c0_15] : memref<16x1xf32, #tpu.memory_space<vmem>>, vector<16x1xf32>
    %cst_16 = arith.constant 0.000000e+00 : f32
    %44 = vector.broadcast %cst_16 : f32 to vector<16x1xf32>
    %45 = arith.select %42, %31, %44 : vector<16x1xi1>, vector<16x1xf32>
    %46 = arith.addf %43, %45 : vector<16x1xf32>
    %c0_17 = arith.constant 0 : index
    %c0_18 = arith.constant 0 : index
    %47 = vector.load %arg5[%c0_17, %c0_18] : memref<16x1xf32, #tpu.memory_space<vmem>>, vector<16x1xf32>
    tpu.vector_store %arg5[%c0_17, %c0_18], %46 {strides = array<i32>} : memref<16x1xf32, #tpu.memory_space<vmem>>, vector<16x1xf32>,
    %c0_i32_19 = arith.constant 0 : i32
    %48 = arith.cmpi eq, %arg1, %c0_i32_19 : i32
    %49 = arith.extui %48 : i1 to i32
    %c0_i32_20 = arith.constant 0 : i32
    %50 = arith.cmpi ne, %49, %c0_i32_20 : i32
    scf.if %50 {
      %c0_21 = arith.constant 0 : index
      %c0_22 = arith.constant 0 : index
      %51 = vector.load %arg5[%c0_21, %c0_22] : memref<16x1xf32, #tpu.memory_space<vmem>>, vector<16x1xf32>
      %52 = vector.shape_cast %51 : vector<16x1xf32> to vector<1x16x1xf32>
      %cst_23 = arith.constant dense<0.000000e+00> : vector<1xf32>
      %53 = vector.multi_reduction <add>, %52, %cst_23 [1, 2] : vector<1x16x1xf32> to vector<1xf32>
      %54 = vector.shape_cast %53 : vector<1xf32> to vector<1x1x1xf32>
      %55 = vector.extract %54[0, 0, 0] : f32 from vector<1x1x1xf32>
      %56 = vector.broadcast %55 : f32 to vector<1x8x128xf32>
      %c0_24 = arith.constant 0 : index
      %c0_25 = arith.constant 0 : index
      %c0_26 = arith.constant 0 : index
      %57 = vector.load %arg4[%c0_24, %c0_25, %c0_26] : memref<1x8x128xf32, #tpu.memory_space<vmem>>, vector<1x8x128xf32>
      tpu.vector_store %arg4[%c0_24, %c0_25, %c0_26], %56 {strides = array<i32>} : memref<1x8x128xf32, #tpu.memory_space<vmem>>, vector<1x8x128xf32>,
    } else {
    }
    return
  }
  func.func @transform_0(%arg0: i32, %arg1: i32) -> (i32, i32) {
    %c1_i32 = arith.constant 1 : i32
    %0 = arith.muli %arg0, %c1_i32 : i32
    %1 = arith.addi %0, %arg1 : i32
    %c0_i32 = arith.constant 0 : i32
    %2 = arith.minsi %1, %c0_i32 : i32
    %c0_i32_0 = arith.constant 0 : i32
    %c0_i32_1 = arith.constant 0 : i32
    return %2, %c0_i32_0 : i32, i32
  }
  func.func @transform_1(%arg0: i32, %arg1: i32) -> (i32, i32) {
    %c1_i32 = arith.constant 1 : i32
    %0 = arith.muli %arg0, %c1_i32 : i32
    %1 = arith.addi %0, %arg1 : i32
    %c0_i32 = arith.constant 0 : i32
    %2 = arith.minsi %1, %c0_i32 : i32
    %c0_i32_0 = arith.constant 0 : i32
    %c0_i32_1 = arith.constant 0 : i32
    return %2, %c0_i32_0 : i32, i32
  }
  func.func @transform_2(%arg0: i32, %arg1: i32) -> (i32, i32, i32) {
    %c0_i32 = arith.constant 0 : i32
    %c0_i32_0 = arith.constant 0 : i32
    %c0_i32_1 = arith.constant 0 : i32
    return %arg0, %c0_i32, %c0_i32_0 : i32, i32, i32
  }
}

</mosaic_0001>

<llo_original>
// kernel: tpu_custom_call.1
$region0: #{tpu_custom_call.1}
  #allocation0 [shape = 'u32[]', space=smem, size = 0x4, offset = 0x4, fixed_abs, tag = 'smem constant byte address 0x4 - core index']
  #allocation1 [shape = 'u32[144,128]{1,0:T(1,128)}', space=vmem, size = 0x12000, scoped, tag = 'internal scratch']
  #allocation2 [shape = 'f32[16,1]{1,0:T(8,128)}', space=vmem, size = 0x2000, scoped, tag = 'scratch operand']
  %s0 = inlined_call_operand.vmem [shape: f32[10,32], index: 0, kind: input, shape index: {}]
  %s1 = inlined_call_operand.vmem [shape: s32[10,1], index: 1, kind: input, shape index: {}]
  %s2 = inlined_call_operand.hbm [shape: f32[1,8,128], index: 2, kind: output, shape index: {}]
  %s3 = sld [smem:[#allocation0]]
  $region26: #{tpu_custom_call.1} parent=0
    _
  %s5 = ssub.s32 1, %s3
  %s6 = scalar_select 0, %s5, %s3
  $region1: #{tpu_custom_call.1} parent=0
    #allocation3 [shape = 'u8[4096]{0}', space=vmem, size = 0x1000, scoped, tag = 'output window, operand 0, single buffered']
    #allocation4 [shape = 's32[1]{0}', space=sflag, size = 0x4, scoped, tag = 'scoped memory for tpu_custom_call.1']
    %7 = vsyncpa [#allocation4], 0
    // Predicated region
    $region2: #{tpu_custom_call.1} parent=1 // pred_check
      _
    $region3: #{tpu_custom_call.1} parent=1 // pred_check_branch
      %9 = sbr.rel (0) target = $region5
    $region4: #{tpu_custom_call.1} parent=1 // pred_region
      %s10 = sadd.s32 0, 0
      %p11 = scmp.lt.s32.totalorder %s10, 0
      %s12 = scalar_select %p11, %s10, 0
      %s13 = smul.u32 2, %s12
      %p14 = scmp.lt.s32.totalorder %s13, 1
      %s15 = scalar_select %p14, %s13, 1
      %s16 = smul.addr %s15, 8
      %s17 = scalar_lea.vmem %s0, %s16
      %s18 = sadd.s32 0, 0
      %p19 = scmp.lt.s32.totalorder %s18, 0
      %s20 = scalar_select %p19, %s18, 0
      %s21 = smul.u32 2, %s20
    $region5: #{tpu_custom_call.1} parent=1 // pred_fallthru
      _
    // Predicated region
    $region6: #{tpu_custom_call.1} parent=1 // pred_check
      _
    $region7: #{tpu_custom_call.1} parent=1 // pred_check_branch
      %23 = sbr.rel (0) target = $region9
    $region8: #{tpu_custom_call.1} parent=1 // pred_region
      %s24 = sadd.s32 0, 0
      %p25 = scmp.lt.s32.totalorder %s24, 0
      %s26 = scalar_select %p25, %s24, 0
      %s27 = smul.u32 2, %s26
      %p28 = scmp.lt.s32.totalorder %s27, 1
      %s29 = scalar_select %p28, %s27, 1
      %s30 = smul.addr %s29, 8
      %s31 = scalar_lea.vmem %s1, %s30
      %s32 = sadd.s32 0, 0
      %p33 = scmp.lt.s32.totalorder %s32, 0
      %s34 = scalar_select %p33, %s32, 0
      %s35 = smul.u32 2, %s34
    $region9: #{tpu_custom_call.1} parent=1 // pred_fallthru
      _
    %s36 = sadd.s32 0, 0
    %p37 = scmp.lt.s32.totalorder %s36, 0
    %s38 = scalar_select %p37, %s36, 0
    %s39 = smul.u32 2, %s38
    %p40 = scmp.lt.s32.totalorder %s39, 1
    %s41 = scalar_select %p40, %s39, 1
    %s42 = smul.addr %s41, 8
    %s43 = scalar_lea.vmem %s0, %s42
    %s44 = sadd.s32 0, 0
    %p45 = scmp.lt.s32.totalorder %s44, 0
    %s46 = scalar_select %p45, %s44, 0
    %s47 = smul.u32 2, %s46
    %p48 = scmp.lt.s32.totalorder %s47, 1
    %s49 = scalar_select %p48, %s47, 1
    %s50 = smul.addr %s49, 8
    %s51 = scalar_lea.vmem %s1, %s50
    %s52 = sadd.s32 0, 0
    %p53 = scmp.lt.s32.totalorder %s52, 0
    %s54 = scalar_select %p53, %s52, 0
    %s55 = smul.u32 2, %s54
    %p56 = scmp.lt.s32.totalorder %s55, 1
    %s57 = scalar_select %p56, %s55, 1
    %s58 = smul.addr %s57, 8
    %s59 = scalar_lea.vmem %s0, %s58
    %s60 = sadd.s32 0, 0
    %p61 = scmp.lt.s32.totalorder %s60, 0
    %s62 = scalar_select %p61, %s60, 0
    %s63 = smul.u32 2, %s62
    %s64 = sadd.s32 0, 0
    %p65 = scmp.lt.s32.totalorder %s64, 0
    %s66 = scalar_select %p65, %s64, 0
    %s67 = smul.u32 2, %s66
    %p68 = scmp.lt.s32.totalorder %s67, 1
    %s69 = scalar_select %p68, %s67, 1
    %s70 = smul.addr %s69, 8
    %s71 = scalar_lea.vmem %s1, %s70
    %s72 = sadd.s32 0, 0
    %p73 = scmp.lt.s32.totalorder %s72, 0
    %s74 = scalar_select %p73, %s72, 0
    %s75 = smul.u32 2, %s74
    %p76 = scmp.eq.s32.totalorder 0, 0
    // Predicated region
    $region10: #{tpu_custom_call.1} parent=1 // pred_check
      %p77 = pneg %p76
    $region11: #{tpu_custom_call.1} parent=1 // pred_check_branch
      %79 = sbr.rel (%p77) target = $region13
    $region12: #{tpu_custom_call.1} parent=1 // pred_region
      %vm80 = vcmask 7168
      %81 = vst.msk [vmem:[#allocation2] sm:$0xff] %vm80, 0.0
      %82 = vst.msk [vmem:[#allocation2 + $0x8] sm:$0xff] %vm80, 0.0
    $region13: #{tpu_custom_call.1} parent=1 // pred_fallthru
      _
    %v83 = vld [vmem:[%s59] sm:$0xff]
    %v84 = vld [vmem:[%s59 + $0x8] sm:$0xff]
    %v85 = vld [vmem:[%s71] sm:$0xff]
    %v86 = vld [vmem:[%s71 + $0x8] sm:$0xff]
    %vm87 = vcmask 261120
    %v88 = vsel %vm87, %v83, -inf
    %89 = vmax.xlane.f32.xlu0 %v88
    %v90 = vpop.xlane.xlu0 %89
    %v91 = vsel %vm87, %v84, -inf
    %92 = vmax.xlane.f32.xlu0 %v91
    %v93 = vpop.xlane.xlu0 %92
    %v94 = vsub.f32 %v83, %v90
    %v95 = vsub.f32 %v84, %v93
    %v96 = vmul.f32 %v94, 1.442695
    %v97 = vpow.pop %v96
    %v98 = vmul.f32 %v95, 1.442695
    %v99 = vpow.pop %v98
    %v100 = vsel %vm87, %v97, 0.0
    %101 = vadd.xlane.f32.xlu0 %v100
    %v102 = vpop.xlane.xlu0 %101
    %v103 = vsel %vm87, %v99, 0.0
    %104 = vadd.xlane.f32.xlu0 %v103
    %v105 = vpop.xlane.xlu0 %104
    %v106 = vlog2.pop %v102
    %v107 = vmul.f32 %v106, 0.6931472
    %v108 = vlog2.pop %v105
    %v109 = vmul.f32 %v108, 0.6931472
    %v110 = vadd.f32 %v107, %v90
    %v111 = vadd.f32 %v109, %v93
    %v112 = vlaneseq
    %v113 = vand.u32 %v112, 127
    %114 = vset.pattern.permute.xlu0 0
    %115 = vperm.xlu0 %114, %v85
    %v116 = vpop.permute.xlu0 %115
    %117 = vset.pattern.permute.xlu0 0
    %118 = vperm.xlu0 %117, %v86
    %v119 = vpop.permute.xlu0 %118
    %vm120 = vcmp.eq.s32.totalorder %v113, %v116
    %vm121 = vcmp.eq.s32.totalorder %v113, %v119
    %v122 = vsel %vm120, 0.9, 0.0033333334
    %v123 = vsel %vm121, 0.9, 0.0033333334
    %v124 = vmul.f32 %v122, %v83
    %v125 = vmul.f32 %v123, %v84
    %v126 = vsel %vm87, %v124, 0.0
    %127 = vadd.xlane.f32.xlu0 %v126
    %v128 = vpop.xlane.xlu0 %127
    %v129 = vsel %vm87, %v125, 0.0
    %130 = vadd.xlane.f32.xlu0 %v129
    %v131 = vpop.xlane.xlu0 %130
    %v132 = vadd.f32 %v110, -0.66520274
    %v133 = vadd.f32 %v111, -0.66520274
    %v134 = vsub.f32 %v132, %v128
    %v135 = vsub.f32 %v133, %v131
    %v136 = vmul.f32 %v83, 0.0033333334
    %v137 = vmul.f32 %v84, 0.0033333334
    %v138 = vadd.f32 %v134, %v136
    %v139 = vadd.f32 %v135, %v137
    %s140 = sadd.s32 0, 0
    %s141 = smul.u32 %s140, 16
    %v142 = vlaneseq
    %v143 = vshrl.u32 %v142, 7
    %v144 = vadd.s32 %v143, 8
    %v145 = vstv %s141
    %v146 = vadd.s32 %v145, %v143
    %v147 = vadd.s32 %v145, %v144
    %vm148 = vcmp.lt.s32.totalorder %v146, 10
    %vm149 = vcmp.lt.s32.totalorder %v147, 10
    %vm150 = vcmp.ne.s32.totalorder %v85, 0
    %vm151 = vcmp.ne.s32.totalorder %v86, 0
    %vm152 = vmand %vm148, %vm150
    %vm153 = vmand %vm149, %vm151
    %v154 = vld [vmem:[#allocation2] sm:$0xff]
    %v155 = vld [vmem:[#allocation2 + $0x8] sm:$0xff]
    %v156 = vsel %vm152, %v138, 0.0
    %v157 = vsel %vm153, %v139, 0.0
    %v158 = vadd.f32 %v154, %v156
    %v159 = vadd.f32 %v155, %v157
    %vm160 = vcmask 7168
    %161 = vst.msk [vmem:[#allocation2] sm:$0xff] %vm160, %v158
    %162 = vst.msk [vmem:[#allocation2 + $0x8] sm:$0xff] %vm160, %v159
    // Predicated region
    $region14: #{tpu_custom_call.1} parent=1 // pred_check
      %p163 = pneg %p76
    $region15: #{tpu_custom_call.1} parent=1 // pred_check_branch
      %165 = sbr.rel (%p163) target = $region17
    $region16: #{tpu_custom_call.1} parent=1 // pred_region
      %v166 = vld [vmem:[#allocation2] sm:$0xff]
      %v167 = vld [vmem:[#allocation2 + $0x8] sm:$0xff]
      %v168 = vsel %vm160, %v166, 0.0
      %v169 = vsel %vm160, %v167, 0.0
      %v170 = vadd.f32 %v168, %v169
      %171 = vadd.xlane.f32.xlu0 %v170
      %v172 = vpop.xlane.xlu0 %171
      %v173 = vrot.slane %v172, 4
      %v174 = vadd.f32 %v172, %v173
      %v175 = vrot.slane %v174, 2
      %v176 = vadd.f32 %v174, %v175
      %v177 = vrot.slane %v176, 1
      %v178 = vadd.f32 %v176, %v177
      %s179 = vtos %v178
      %v180 = vstv %s179
      %181 = vst [vmem:[#allocation3] sm:$0xff] %v180
    $region17: #{tpu_custom_call.1} parent=1 // pred_fallthru
      _
    // Predicated region
    $region18: #{tpu_custom_call.1} parent=1 // pred_check
      _
    $region19: #{tpu_custom_call.1} parent=1 // pred_check_branch
      %183 = sbr.rel (0) target = $region21
    $region20: #{tpu_custom_call.1} parent=1 // pred_region
      %s185 = ssub.s32 128, 128
      %186 = vsyncadd [#allocation4], %s185
      %s188 = sshll.u32 [#allocation3], 4
      %s189 = int_to_ptr.vmem [resolvable:$true] %s188
      %191 = dma.vmem_to_hbm [thread:$0]  %s189, 128, %s2, [#allocation4]
    $region21: #{tpu_custom_call.1} parent=1 // pred_fallthru
      _
    // Predicated region
    $region22: #{tpu_custom_call.1} parent=1 // pred_check
      _
    $region23: #{tpu_custom_call.1} parent=1 // pred_check_branch
      %193 = sbr.rel (0) target = $region25
    $region24: #{tpu_custom_call.1} parent=1 // pred_region
      %194 = dma.done [#allocation4], 128
    $region25: #{tpu_custom_call.1} parent=1 // pred_fallthru
      _
    %195 = vsyncpa [#allocation4], 1

</llo_original>
